<compile_context>
chip_gen: v7x
topology: tpu7x:2x2x1
jax: 0.10.0
libtpu: 0.0.40
codegen_flags: <defaults>
</compile_context>

<pallas_src>
import functools

import jax
import jax.numpy as jnp
from jax.experimental import pallas as pl
from jax.experimental.pallas import tpu as pltpu

# Size-1 squeezed block dim (pl.Squeezed() on recent JAX; `None` is the classic spelling).
_SQUEEZED = pl.Squeezed() if hasattr(pl, "Squeezed") else None


def _round_up(v: int, m: int) -> int:
    return (v + m - 1) // m * m


def _vmem_capacity_bytes() -> int:
    try:
        return int(pltpu.get_tpu_info().vmem_capacity_bytes)
    except Exception:
        return 64 * 1024 * 1024  # conservative (v7x-sized) default


# ----------------------------------------------------------------------------------
# Primary (dense-tile) path
# ----------------------------------------------------------------------------------
def _dense_copy_kernel(x_ref, o_ref):
    # Both refs are dense (cpg, hw_t) VMEM tiles. The channel shuffle itself lives
    # entirely in the BlockSpec index maps: the output DMA scatters channel-group `a`
    # to output channels a, a+g, a+2g, ... Full-tile store -> unmasked vst.
    o_ref[...] = x_ref[...]


def _channel_shuffle_dense(x, g: int):
    N, C, H, W = x.shape
    cpg = C // g
    hw = H * W
    itemsize = jnp.dtype(x.dtype).itemsize

    # ---- generation-aware tile sizing ---------------------------------------------
    # Double-buffered (in + out) block pairs must fit comfortably in VMEM:
    #   v5e/v6e: 128 MiB physical -> 64 MiB pipeline budget -> 16 MiB target blocks
    #   v7x    :  64 MiB physical -> 32 MiB pipeline budget ->  8 MiB target blocks
    vmem_cap = _vmem_capacity_bytes()
    pipeline_budget = min(vmem_cap // 2, 64 * 1024 * 1024)
    target_block_bytes = pipeline_budget // 4

    sub = max(8, 32 // itemsize)            # sublane multiple: 8 f32, 16 bf16, 32 int8
    cpg_pad = _round_up(cpg, sub)           # sublane-padded rows of each VMEM tile
    max_lanes = max(128, target_block_bytes // (cpg_pad * itemsize))

    if _round_up(hw, 128) <= max_lanes:
        # Full spatial extent per block (full-extent block is always a legal shape).
        # TODO(synk): for hw < 128 lane utilization is hw/128; such late-stage shapes are
        # better served by folding the shuffle into the consumer's index_map.
        hw_t = hw
    else:
        max_tiles = max(1, max_lanes // 128)
        if hw % 128 == 0:
            # Largest 128-multiple that divides hw -> no ragged (masked) tail tile.
            total = hw // 128
            best = 1
            for d in range(1, min(max_tiles, total) + 1):
                if total % d == 0:
                    best = d
            hw_t = best * 128
        else:
            hw_t = max_tiles * 128          # ragged tail tile handled (masked) by Pallas
    n_hw = pl.cdiv(hw, hw_t)

    # Real double-buffered footprint (with sublane/lane padding) -> vmem limit.
    padded_block = cpg_pad * _round_up(hw_t, 128) * itemsize
    footprint = 4 * padded_block            # 2 pipeline stages x (in + out)
    vmem_limit = int(min(vmem_cap - 16 * 1024 * 1024, footprint + 4 * 1024 * 1024))
    vmem_limit = max(vmem_limit, 8 * 1024 * 1024)

    # Free reshape: channel shuffle == transpose of the (g, cpg) channel factors.
    x4 = x.reshape(N, g, cpg, hw)           # input channel c_in = a*cpg + j  -> (a, j)

    out4 = pl.pallas_call(
        _dense_copy_kernel,
        out_shape=jax.ShapeDtypeStruct((N, cpg, g, hw), x.dtype),
        grid=(N, g, n_hw),                  # N*g >= 2 parallel steps keeps both v7x TCs busy
        in_specs=[
            # x4[n, a, :, tile t] -> dense (cpg, hw_t) VMEM tile (contiguous HBM read).
            pl.BlockSpec((_SQUEEZED, _SQUEEZED, cpg, hw_t),
                         lambda n, a, t: (n, a, 0, t)),
        ],
        # out4[n, :, a, tile t] <- same dense tile (strided HBM write, rows of hw_t).
        out_specs=pl.BlockSpec((_SQUEEZED, cpg, _SQUEEZED, hw_t),
                               lambda n, a, t: (n, 0, a, t)),
        compiler_params=pltpu.CompilerParams(
            dimension_semantics=("parallel", "parallel", "parallel"),
            vmem_limit_bytes=vmem_limit,
        ),
        cost_estimate=pl.CostEstimate(
            flops=0, transcendentals=0,
            bytes_accessed=2 * N * C * hw * itemsize),
    )(x4)

    # Free reshape: (N, cpg, g, hw) -> (N, C, H, W) with c_out = j*g + a.
    return out4.reshape(N, C, H, W)


# ----------------------------------------------------------------------------------
# Fallback path (previously verified structure) — used only if the dense path fails
# to lower/compile on some backend. Correct but slower (masked per-group stores).
# ----------------------------------------------------------------------------------
def _fallback_kernel(x_ref, o_ref, *, groups: int):
    for a in range(groups):
        o_ref[:, a, :] = x_ref[a]


def _channel_shuffle_fallback(x, g: int):
    N, C, H, W = x.shape
    cpg = C // g
    hw = H * W
    itemsize = jnp.dtype(x.dtype).itemsize
    slab_bytes = C * hw * itemsize
    if slab_bytes <= (2 << 20) or hw <= 128:
        hw_t = hw
    else:
        lanes = ((2 << 20) // (C * itemsize)) // 128 * 128
        hw_t = int(min(hw, max(128, lanes)))
    n_hw = pl.cdiv(hw, hw_t)

    x4 = x.reshape(N, g, cpg, hw)
    out4 = pl.pallas_call(
        functools.partial(_fallback_kernel, groups=g),
        out_shape=jax.ShapeDtypeStruct((N, cpg, g, hw), x.dtype),
        grid=(N, n_hw),
        in_specs=[pl.BlockSpec((_SQUEEZED, g, cpg, hw_t), lambda n, t: (n, 0, 0, t))],
        out_specs=pl.BlockSpec((_SQUEEZED, cpg, g, hw_t), lambda n, t: (n, 0, 0, t)),
        compiler_params=pltpu.CompilerParams(
            dimension_semantics=("parallel", "parallel"),
            vmem_limit_bytes=32 * 1024 * 1024,
        ),
    )(x4)
    return out4.reshape(N, C, H, W)


# ----------------------------------------------------------------------------------
# Public wrapper
# ----------------------------------------------------------------------------------
def channel_shuffle(x, groups: int):
    """Pallas implementation of ShuffleBlock.forward for NCHW input."""
    N, C, H, W = x.shape
    g = int(groups)
    assert C % g == 0, "C must be divisible by groups"
    if g == 1:
        return x  # shuffle with a single group is the identity permutation
    try:
        out = _channel_shuffle_dense(x, g)
        # Force materialization here so any deferred lowering/compile error is caught
        # and we can fall back to the verified structure.
        return jax.block_until_ready(out)
    except Exception:  # pragma: no cover - safety net only
        return _channel_shuffle_fallback(x, g)


def channel_shuffle_ref(x, groups: int):
    """Pure-JAX reference mirroring the PyTorch forward."""
    N, C, H, W = x.shape
    g = groups
    return (
        x.reshape(N, g, C // g, H, W)
        .transpose(0, 2, 1, 3, 4)
        .reshape(N, C, H, W)
    )


if __name__ == "__main__":
    groups = 2
    N, C, H, W = 2, 4, 16, 16  # ShuffleBlock has no parameters to initialize.

    key = jax.random.PRNGKey(0)
    x = jax.random.normal(key, (N, C, H, W), dtype=jnp.float32)

    y = jax.block_until_ready(channel_shuffle(x, groups))

    y_ref = channel_shuffle_ref(x, groups)
    assert y.shape == (N, C, H, W)
    assert jnp.allclose(y, y_ref), "Pallas channel shuffle mismatch vs reference"

    print("KERNEL_OK")
</pallas_src>

<mosaic_0001>
module attributes {stable_mosaic.version = 11 : i64} {
  func.func @_fallback_kernel(%arg0: i32, %arg1: i32, %arg2: memref<1x2x2x256xf32, #tpu.memory_space<vmem>>, %arg3: memref<1x2x2x256xf32, #tpu.memory_space<vmem>>) attributes {dimension_semantics = [#tpu.dimension_semantics<parallel>, #tpu.dimension_semantics<parallel>], iteration_bounds = array<i64: 2, 1>, scalar_prefetch = 0 : i64, scratch_operands = 0 : i64, tpu.core_type = #tpu.core_type<tc>, window_params = [{transform_indices = @transform_0, window_bounds = array<i64: 1, 2, 2, 256>}, {transform_indices = @transform_1, window_bounds = array<i64: 1, 2, 2, 256>}]} {
    %c0 = arith.constant 0 : index
    %c0_0 = arith.constant 0 : index
    %c0_1 = arith.constant 0 : index
    %c0_2 = arith.constant 0 : index
    %0 = vector.load %arg2[%c0, %c0_0, %c0_1, %c0_2] : memref<1x2x2x256xf32, #tpu.memory_space<vmem>>, vector<1x1x2x256xf32>
    %1 = vector.shape_cast %0 : vector<1x1x2x256xf32> to vector<2x256xf32>
    %c0_3 = arith.constant 0 : index
    %c0_4 = arith.constant 0 : index
    %c0_5 = arith.constant 0 : index
    %c0_6 = arith.constant 0 : index
    %2 = vector.load %arg3[%c0_3, %c0_4, %c0_5, %c0_6] : memref<1x2x2x256xf32, #tpu.memory_space<vmem>>, vector<1x2x1x256xf32>
    %3 = vector.shape_cast %2 : vector<1x2x1x256xf32> to vector<2x256xf32>
    %4 = vector.shape_cast %1 : vector<2x256xf32> to vector<1x2x1x256xf32>
    tpu.vector_store %arg3[%c0_3, %c0_4, %c0_5, %c0_6], %4 {strides = array<i32>} : memref<1x2x2x256xf32, #tpu.memory_space<vmem>>, vector<1x2x1x256xf32>,
    %c0_7 = arith.constant 0 : index
    %c1 = arith.constant 1 : index
    %c0_8 = arith.constant 0 : index
    %c0_9 = arith.constant 0 : index
    %5 = vector.load %arg2[%c0_7, %c1, %c0_8, %c0_9] : memref<1x2x2x256xf32, #tpu.memory_space<vmem>>, vector<1x1x2x256xf32>
    %6 = vector.shape_cast %5 : vector<1x1x2x256xf32> to vector<2x256xf32>
    %c0_10 = arith.constant 0 : index
    %c0_11 = arith.constant 0 : index
    %c1_12 = arith.constant 1 : index
    %c0_13 = arith.constant 0 : index
    %7 = vector.load %arg3[%c0_10, %c0_11, %c1_12, %c0_13] : memref<1x2x2x256xf32, #tpu.memory_space<vmem>>, vector<1x2x1x256xf32>
    %8 = vector.shape_cast %7 : vector<1x2x1x256xf32> to vector<2x256xf32>
    %9 = vector.shape_cast %6 : vector<2x256xf32> to vector<1x2x1x256xf32>
    tpu.vector_store %arg3[%c0_10, %c0_11, %c1_12, %c0_13], %9 {strides = array<i32>} : memref<1x2x2x256xf32, #tpu.memory_space<vmem>>, vector<1x2x1x256xf32>,
    return
  }
  func.func @transform_0(%arg0: i32, %arg1: i32) -> (i32, i32, i32, i32) {
    %c0_i32 = arith.constant 0 : i32
    %c0_i32_0 = arith.constant 0 : i32
    %c0_i32_1 = arith.constant 0 : i32
    return %arg0, %c0_i32, %c0_i32_0, %arg1 : i32, i32, i32, i32
  }
  func.func @transform_1(%arg0: i32, %arg1: i32) -> (i32, i32, i32, i32) {
    %c0_i32 = arith.constant 0 : i32
    %c0_i32_0 = arith.constant 0 : i32
    %c0_i32_1 = arith.constant 0 : i32
    return %arg0, %c0_i32, %c0_i32_0, %arg1 : i32, i32, i32, i32
  }
}

</mosaic_0001>

<llo_original>
// kernel: tpu_custom_call.1
$region0: #{tpu_custom_call.1}
  #allocation0 [shape = 'u32[]', space=smem, size = 0x4, offset = 0x4, fixed_abs, tag = 'smem constant byte address 0x4 - core index']
  #allocation1 [shape = 'u32[144,128]{1,0:T(1,128)}', space=vmem, size = 0x12000, scoped, tag = 'internal scratch']
  %s0 = inlined_call_operand.hbm [shape: f32[2,2,2,256], index: 0, kind: input, shape index: {}]
  %s1 = inlined_call_operand.hbm [shape: f32[2,2,2,256], index: 1, kind: output, shape index: {}]
  %s2 = sld [smem:[#allocation0]]
  $region41: #{tpu_custom_call.1} parent=0
    _
  %s4 = ssub.s32 1, %s2
  %s5 = scalar_select 0, %s4, %s2
  $region1: #{tpu_custom_call.1} parent=0
    #allocation2 [shape = 'u8[8192]{0}', space=vmem, size = 0x2000, scoped, tag = 'input window, operand 0']
    #allocation3 [shape = 's32[2]{0}', space=sflag, size = 0x8, scoped, tag = 'scoped memory for tpu_custom_call.1']
    #allocation4 [shape = 's32[2]{0}', space=sflag, size = 0x8, scoped, tag = 'scoped memory for tpu_custom_call.1']
    #allocation5 [shape = 'u8[8192]{0}', space=vmem, size = 0x2000, scoped, tag = 'output window, operand 0']
    %6 = vsyncpa [#allocation3], 0
    %s7 = scalar_lea.sflag [#allocation3], 1
    %8 = vsyncpa %s7, 0
    %9 = vsyncpa [#allocation4], 0
    %s10 = scalar_lea.sflag [#allocation4], 1
    %11 = vsyncpa %s10, 0
    loop: start=0, step=1, limit=4
    $region2: #{tpu_custom_call.1} parent=1 // loop_pre_header
      _
    $region3: #{tpu_custom_call.1} parent=1 // loop_header
      %s13 = sphi 0, %s17
      %p14 = scmp.ge.s32.totalorder %s13, 4
      %s20 = sphi 0, %s32
      %s21 = sphi 0, %s28
      %s22 = sphi 0, %s20
      %s23 = sphi 0, %s21
      %s24 = sphi 0, %s22
      %s25 = sphi 0, %s23
      %s37 = sphi 0, %s39
      %s40 = sphi 0, %s37
      %s41 = sphi 0, %s40
      %s57 = sphi 0, %s41
      %s65 = sphi 0, %s67
      %s68 = sphi 0, %s65
      %s69 = sphi 0, %s68
      %s85 = sphi 0, %s69
    $region4: #{tpu_custom_call.1} parent=1 // loop_header_branch
      %16 = sbr.rel (%p14) target = $region8
    $region5: #{tpu_custom_call.1} parent=1 // loop_body
      %s18 = ssub.s32 %s13, 1
      %s19 = ssub.s32 %s13, 2
      %s26 = sadd.s32 1, %s21
      %p27 = scmp.ge.s32.totalorder %s26, 1
      %s28 = scalar_select %p27, 0, %s26
      %s29 = sadd.s32 1, %s20
      %s30 = scalar_select %p27, %s29, %s20
      %p31 = scmp.ge.s32.totalorder %s30, 2
      %s32 = scalar_select %p31, 0, %s30
      %s33 = ssub.s32 %s20, %s32
      %s34 = ssub.s32 %s21, %s28
      %s35 = sor.u32 %s33, %s34
      %p36 = scmp.eq.s32.totalorder %s35, 0
      %s38 = sadd.s32 %s37, 1
      %s39 = scalar_select %p36, %s37, %s38
      %p42 = pneg %p36
      %p43 = scmp.eq.s32.totalorder %s13, 1
      %p44 = por %p42, %p43
      %p45 = scmp.ne.s32.totalorder %s37, %s40
      %p46 = scmp.eq.s32.totalorder %s13, 0
      %p47 = por %p45, %p46
      %p48 = scmp.ne.s32.totalorder %s37, %s40
      %p49 = scmp.eq.s32.totalorder %s18, 1
      %p50 = por %p48, %p49
      %p51 = scmp.ne.s32.totalorder %s40, %s41
      %p52 = scmp.eq.s32.totalorder %s18, 0
      %p53 = por %p51, %p52
      %p54 = scmp.ne.s32.totalorder %s40, %s41
      %p55 = scmp.eq.s32.totalorder %s19, 1
      %p56 = por %p54, %p55
      %p58 = scmp.ne.s32.totalorder %s41, %s57
      %p59 = scmp.eq.s32.totalorder %s19, 0
      %p60 = por %p58, %p59
      %s61 = ssub.s32 %s20, %s32
      %s62 = ssub.s32 %s21, %s28
      %s63 = sor.u32 %s61, %s62
      %p64 = scmp.eq.s32.totalorder %s63, 0
      %s66 = sadd.s32 %s65, 1
      %s67 = scalar_select %p64, %s65, %s66
      %p70 = pneg %p64
      %p71 = scmp.eq.s32.totalorder %s13, 1
      %p72 = por %p70, %p71
      %p73 = scmp.ne.s32.totalorder %s65, %s68
      %p74 = scmp.eq.s32.totalorder %s13, 0
      %p75 = por %p73, %p74
      %p76 = scmp.ne.s32.totalorder %s65, %s68
      %p77 = scmp.eq.s32.totalorder %s18, 1
      %p78 = por %p76, %p77
      %p79 = scmp.ne.s32.totalorder %s68, %s69
      %p80 = scmp.eq.s32.totalorder %s18, 0
      %p81 = por %p79, %p80
      %p82 = scmp.ne.s32.totalorder %s68, %s69
      %p83 = scmp.eq.s32.totalorder %s19, 1
      %p84 = por %p82, %p83
      %p86 = scmp.ne.s32.totalorder %s69, %s85
      %p87 = scmp.eq.s32.totalorder %s19, 0
      %p88 = por %p86, %p87
      %p89 = scmp.le.s32.totalorder 1, %s13
      %p90 = scmp.lt.s32.totalorder %s13, 3
      %p91 = pnand %p89, %p90
      %p92 = pneg %p91
      // Predicated region
      $region9: #{tpu_custom_call.1} parent=5 // pred_check
        _
      $region10: #{tpu_custom_call.1} parent=5 // pred_check_branch
        %94 = sbr.rel (%p91) target = $region12
      $region11: #{tpu_custom_call.1} parent=5 // pred_region
        %s95 = ssub.s32 %s13, 1
      $region12: #{tpu_custom_call.1} parent=5 // pred_fallthru
        _
      %p96 = scmp.lt.s32.totalorder %s13, 2
      // Predicated region
      $region13: #{tpu_custom_call.1} parent=5 // pred_check
        %p97 = pneg %p96
      $region14: #{tpu_custom_call.1} parent=5 // pred_check_branch
        %99 = sbr.rel (%p97) target = $region16
      $region15: #{tpu_custom_call.1} parent=5 // pred_region
        // Predicated region
        $region17: #{tpu_custom_call.1} parent=15 // pred_check
          %p100 = pneg %p47
        $region18: #{tpu_custom_call.1} parent=15 // pred_check_branch
          %102 = sbr.rel (%p100) target = $region20
        $region19: #{tpu_custom_call.1} parent=15 // pred_region
          %s103 = sand.u32 %s37, 1
          %s104 = scalar_lea.sflag [#allocation3], %s103
          %s105 = sand.u32 %s37, 1
          %s106 = smul.addr %s105, 8
          %s107 = scalar_lea.vmem [#allocation2], %s106
          %s108 = smul.u32 2, %s21
          %s110 = ssub.s32 128, 128
          %111 = vsyncadd %s104, %s110
          %s112 = smul.addr %s20, 4
          %s113 = sadd.s32 %s108, %s112
          %s114 = smul.addr %s113, 32
          %s115 = scalar_lea.hbm %s0, %s114
          %s116 = sshll.u32 %s107, 4
          %s117 = int_to_ptr.vmem [resolvable:$true] %s116
          %122 = dma.hbm_to_vmem [thread:$0]  %s115, 128, %s117, %s104, 64, 64, 4
        $region20: #{tpu_custom_call.1} parent=15 // pred_fallthru
          _
      $region16: #{tpu_custom_call.1} parent=5 // pred_fallthru
        _
      %p123 = scmp.le.s32.totalorder 1, %s13
      %p124 = scmp.lt.s32.totalorder %s13, 3
      %p125 = pnand %p123, %p124
      %p126 = pneg %p125
      // Predicated region
      $region21: #{tpu_custom_call.1} parent=5 // pred_check
        _
      $region22: #{tpu_custom_call.1} parent=5 // pred_check_branch
        %128 = sbr.rel (%p125) target = $region24
      $region23: #{tpu_custom_call.1} parent=5 // pred_region
        %s129 = ssub.s32 %s13, 1
        %s130 = sand.u32 %s40, 1
        %s131 = scalar_lea.sflag [#allocation3], %s130
        %s132 = sand.u32 %s40, 1
        %s133 = smul.addr %s132, 8
        %s134 = scalar_lea.vmem [#allocation2], %s133
        // Predicated region
        $region25: #{tpu_custom_call.1} parent=23 // pred_check
          %p135 = pneg %p53
        $region26: #{tpu_custom_call.1} parent=23 // pred_check_branch
          %137 = sbr.rel (%p135) target = $region28
        $region27: #{tpu_custom_call.1} parent=23 // pred_region
          %138 = dma.done %s131, 128
        $region28: #{tpu_custom_call.1} parent=23 // pred_fallthru
          _
        %s139 = sand.u32 %s40, 1
        %s140 = scalar_lea.sflag [#allocation3], %s139
        %s141 = sand.u32 %s40, 1
        %s142 = smul.addr %s141, 8
        %s143 = scalar_lea.vmem [#allocation2], %s142
        %p144 = pneg %p53
        %p145 = pneg %p50
        %p146 = pneg %p81
        %p147 = pneg %p78
        %s148 = sand.u32 %s68, 1
        %s149 = scalar_lea.sflag [#allocation4], %s148
        %s150 = sand.u32 %s68, 1
        %s151 = smul.addr %s150, 8
        %s152 = scalar_lea.vmem [#allocation5], %s151
        %s153 = smul.u32 2, %s23
        %s154 = smul.u32 2, %s23
        %v155 = vld [vmem:[%s134] sm:$0xf]
        %v158 = vunpack.c.l.s4 1966171168
        %v159 = vunpack.c.0.s8 %v158
        %v160 = vlaneseq
        %v161 = vshrl.u32 %v160, 7
        %v162 = vsub.s32 %v159, %v161
        %v163 = vrot.slane %v155, %v162
        %v164 = vcombine.high %v163, %v163
        %v167 = vlaneseq
        %vm168 = vcmp.ge.s32.totalorder %v167, 0
        %vm169 = vcmp.lt.s32.totalorder %v167, 256
        %vm170 = vmand %vm168, %vm169
        %171 = vst.msk [vmem:[%s152] ss:$2 sm:$0x3] %vm170, %v163
        %s172 = scalar_lea.vmem %s152, 4 [#allocation5]
        %173 = vst.msk [vmem:[%s172] ss:$2 sm:$0x3] %vm170, %v164
        %s174 = scalar_lea.vmem %s134, 4 [#allocation2]
        %v175 = vld [vmem:[%s174] sm:$0xf]
        %v178 = vunpack.c.l.s4 1966171168
        %v179 = vunpack.c.0.s8 %v178
        %v180 = vlaneseq
        %v181 = vshrl.u32 %v180, 7
        %v182 = vsub.s32 %v179, %v181
        %v183 = vrot.slane %v175, %v182
        %v184 = vcombine.high %v183, %v183
        %s187 = scalar_lea.vmem %s152, 1 [#allocation5]
        %188 = vst.msk [vmem:[%s187] ss:$2 sm:$0x3] %vm170, %v183
        %s189 = scalar_lea.vmem %s152, 5 [#allocation5]
        %190 = vst.msk [vmem:[%s189] ss:$2 sm:$0x3] %vm170, %v184
        %s191 = sand.u32 %s68, 1
        %s192 = scalar_lea.sflag [#allocation4], %s191
        %s193 = sand.u32 %s68, 1
        %s194 = smul.addr %s193, 8
        %s195 = scalar_lea.vmem [#allocation5], %s194
        // Predicated region
        $region29: #{tpu_custom_call.1} parent=23 // pred_check
          %p196 = pneg %p78
        $region30: #{tpu_custom_call.1} parent=23 // pred_check_branch
          %198 = sbr.rel (%p196) target = $region32
        $region31: #{tpu_custom_call.1} parent=23 // pred_region
          %s199 = smul.u32 2, %s23
          %s201 = ssub.s32 128, 128
          %202 = vsyncadd %s192, %s201
          %s203 = smul.addr %s22, 4
          %s204 = sadd.s32 %s199, %s203
          %s205 = smul.addr %s204, 32
          %s206 = scalar_lea.hbm %s1, %s205
          %s207 = sshll.u32 %s195, 4
          %s208 = int_to_ptr.vmem [resolvable:$true] %s207
          %213 = dma.vmem_to_hbm [thread:$0]  %s208, 128, %s206, %s192, 64, 64, 4
        $region32: #{tpu_custom_call.1} parent=23 // pred_fallthru
          _
      $region24: #{tpu_custom_call.1} parent=5 // pred_fallthru
        _
      %p214 = scmp.le.s32.totalorder 2, %s13
      // Predicated region
      $region33: #{tpu_custom_call.1} parent=5 // pred_check
        %p215 = pneg %p214
      $region34: #{tpu_custom_call.1} parent=5 // pred_check_branch
        %217 = sbr.rel (%p215) target = $region36
      $region35: #{tpu_custom_call.1} parent=5 // pred_region
        %s218 = ssub.s32 %s13, 2
        // Predicated region
        $region37: #{tpu_custom_call.1} parent=35 // pred_check
          %p219 = pneg %p84
        $region38: #{tpu_custom_call.1} parent=35 // pred_check_branch
          %221 = sbr.rel (%p219) target = $region40
        $region39: #{tpu_custom_call.1} parent=35 // pred_region
          %s222 = sand.u32 %s69, 1
          %s223 = scalar_lea.sflag [#allocation4], %s222
          %s224 = sand.u32 %s69, 1
          %s225 = smul.addr %s224, 8
          %s226 = scalar_lea.vmem [#allocation5], %s225
          %227 = dma.done %s223, 128
        $region40: #{tpu_custom_call.1} parent=35 // pred_fallthru
          _
      $region36: #{tpu_custom_call.1} parent=5 // pred_fallthru
        _
    $region6: #{tpu_custom_call.1} parent=1 // loop_footer
      %s17 = sadd.s32 1, %s13
    $region7: #{tpu_custom_call.1} parent=1 // loop_footer_branch
      %12 = sbr.rel target = $region3
    $region8: #{tpu_custom_call.1} parent=1 // loop_exit
      _
    %228 = vsyncpa [#allocation3], 1
    %s229 = scalar_lea.sflag [#allocation3], 1
    %230 = vsyncpa %s229, 1
    %231 = vsyncpa [#allocation4], 1
    %s232 = scalar_lea.sflag [#allocation4], 1
    %233 = vsyncpa %s232, 1

</llo_original>
